<compile_context>
chip_gen: v7x
topology: tpu7x:2x2x1
jax: 0.10.0
libtpu: 0.0.40
codegen_flags: <defaults>
</compile_context>

<pallas_src>
import functools

import jax
import jax.numpy as jnp
from jax.experimental import pallas as pl
from jax.experimental.pallas import tpu as pltpu


def _conv_fused_kernel(x_ref, w_ref, o_ref, *, offsets, m_lanes, cin_pad, n_batch):
    # x_ref: (N, CIN_PAD, PW)   flattened + zero-padded spatial, channels-major
    # w_ref: (CO_PAD, K_PAD)    [flattened taps | bias column | zeros]
    # o_ref: (N, CO_PAD, M)     lane-dense transposed output slab per batch
    stacks = []
    for n in range(n_batch):                                   # statically unrolled (N=2)
        xv = x_ref[n]                                          # (CIN_PAD, PW) small load
        # 9 shifted (CIN_PAD, M) slices -> aligned 8-row blocks of the im2col stack.
        parts = [xv[:, off:off + m_lanes] for off in offsets]
        # Tail block: row 0 = ones (bias row), rows 1.. = zeros (padded K rows).
        parts.append(
            (jax.lax.broadcasted_iota(jnp.int32, (cin_pad, m_lanes), 0) == 0)
            .astype(jnp.float32))
        stacks.append(jnp.concatenate(parts, axis=0))          # (K_PAD, M), aligned concat
    # Concatenate both batch elements along lanes (aligned at a 256 boundary).
    rhs = stacks[0] if n_batch == 1 else jnp.concatenate(stacks, axis=1)   # (K_PAD, N*M)

    # ONE MXU matmul; bias is included via the augmented ones-row / bias column.
    res = jnp.dot(w_ref[...], rhs, preferred_element_type=jnp.float32)     # (CO_PAD, N*M)

    for n in range(n_batch):                                   # aligned 256-lane slabs
        o_ref[n] = res[:, n * m_lanes:(n + 1) * m_lanes]


def conv2d_pallas(x_nchw, weight_oihw, bias):
    """Conv2d(stride=1, padding=0) forward, matches torch.nn.Conv2d semantics."""
    N, Cin, H, W = x_nchw.shape
    Cout, Cin2, KH, KW = weight_oihw.shape
    assert Cin == Cin2
    OH, OW = H - KH + 1, W - KW + 1

    CO_PAD = 128                              # lane-dense output channels (64 -> 128)
    CIN_PAD = ((Cin + 7) // 8) * 8            # 3 -> 8: aligned sublane blocks per tap
    M = H * W                                 # one wrapped output column per input pixel
    PW = M + (KH - 1) * W + (KW - 1)          # flat spatial length incl. shift slack
    K_PAD = (KH * KW + 1) * CIN_PAD           # 9 tap blocks + 1 bias/zero block = 80

    # ---- cheap wrapper-side prep: one reshape + ONE pad for x, no transposes of x ----
    x_flat = x_nchw.astype(jnp.float32).reshape(N, Cin, M)
    x_flat = jnp.pad(x_flat, ((0, 0), (0, CIN_PAD - Cin), (0, PW - M)))

    # weight (Cout, Cin, KH, KW) -> (Cout, KH, KW, CIN_PAD) -> (Cout, 9*CIN_PAD);
    # column index k = (ki*KW + kj)*CIN_PAD + c matches the RHS row order in-kernel.
    # Bias is appended as one extra column (row 9*CIN_PAD of the RHS is all-ones).
    w_t = jnp.transpose(weight_oihw.astype(jnp.float32), (0, 2, 3, 1))
    w_t = jnp.pad(w_t, ((0, 0), (0, 0), (0, 0), (0, CIN_PAD - Cin)))
    w_t = w_t.reshape(Cout, KH * KW * CIN_PAD)
    w_aug = jnp.concatenate([w_t, bias.astype(jnp.float32)[:, None]], axis=1)
    w_aug = jnp.pad(w_aug, ((0, CO_PAD - Cout), (0, K_PAD - w_aug.shape[1])))  # (128, 80)

    offsets = tuple(ki * W + kj for ki in range(KH) for kj in range(KW))
    kernel = functools.partial(_conv_fused_kernel, offsets=offsets, m_lanes=M,
                               cin_pad=CIN_PAD, n_batch=N)

    flops = 2 * N * OH * OW * Cout * Cin * KH * KW
    bytes_accessed = (x_flat.size + w_aug.size + N * CO_PAD * M) * 4

    out_wide = pl.pallas_call(
        kernel,
        out_shape=jax.ShapeDtypeStruct((N, CO_PAD, M), jnp.float32),
        # Single grid step: the whole problem (<1 MB) lives in VMEM at once, so there
        # is no per-step pipeline overhead and the MXU sees one (128,K)@(K,512) push.
        grid=(1,),
        in_specs=[
            pl.BlockSpec((N, CIN_PAD, PW), lambda i: (0, 0, 0)),   # all batches of x
            pl.BlockSpec((CO_PAD, K_PAD), lambda i: (0, 0)),       # dense 2D weights
        ],
        out_specs=pl.BlockSpec((N, CO_PAD, M), lambda i: (0, 0, 0)),
        compiler_params=pltpu.CompilerParams(
            dimension_semantics=("arbitrary",),
        ),
        cost_estimate=pl.CostEstimate(
            flops=flops, transcendentals=0, bytes_accessed=bytes_accessed),
    )(x_flat, w_aug)

    # (N, CO_PAD, H*W) -> NCHW: free reshape + ONE slice (drops channel pad and the
    # wrapped/invalid spatial columns). Kernel output is already channel-major.
    return out_wide.reshape(N, CO_PAD, H, W)[:, :Cout, :OH, :OW]


if __name__ == "__main__":
    key = jax.random.PRNGKey(0)
    kx, kw, kb = jax.random.split(key, 3)

    # Shapes consistent with nn.Conv2d(3, 64, 3): batch=2, C=3, H=W=16.
    x = jax.random.normal(kx, (2, 3, 16, 16), dtype=jnp.float32)

    # Deterministic parameter init (torch-like uniform in +/- 1/sqrt(fan_in)).
    fan_in = 3 * 3 * 3
    bound = 1.0 / (fan_in ** 0.5)
    weight = jax.random.uniform(kw, (64, 3, 3, 3), minval=-bound, maxval=bound,
                                dtype=jnp.float32)
    bias = jax.random.uniform(kb, (64,), minval=-bound, maxval=bound,
                              dtype=jnp.float32)

    conv = jax.jit(conv2d_pallas)          # fuses the tiny wrapper pads/slices around the call
    out = jax.block_until_ready(conv(x, weight, bias))

    # Cross-check against XLA's conv for correctness.
    ref = jax.lax.conv_general_dilated(
        x, weight, window_strides=(1, 1), padding="VALID",
        dimension_numbers=("NCHW", "OIHW", "NCHW")) + bias[None, :, None, None]
    assert out.shape == (2, 64, 14, 14), out.shape
    assert jnp.allclose(out, ref, atol=1e-4, rtol=1e-4)

    print("KERNEL_OK")
</pallas_src>

<mosaic_0001>
module attributes {stable_mosaic.version = 11 : i64} {
  func.func @_conv_fused_kernel(%arg0: i32, %arg1: memref<2x8x290xf32, #tpu.memory_space<vmem>>, %arg2: memref<128x80xf32, #tpu.memory_space<vmem>>, %arg3: memref<2x128x256xf32, #tpu.memory_space<vmem>>) attributes {dimension_semantics = [#tpu.dimension_semantics<arbitrary>], iteration_bounds = array<i64: 1>, scalar_prefetch = 0 : i64, scratch_operands = 0 : i64, tpu.core_type = #tpu.core_type<tc>, window_params = [{pipeline_mode = #tpu.pipeline_mode<synchronous>, transform_indices = @transform_0, window_bounds = array<i64: 2, 8, 290>}, {pipeline_mode = #tpu.pipeline_mode<synchronous>, transform_indices = @transform_1, window_bounds = array<i64: 128, 80>}, {pipeline_mode = #tpu.pipeline_mode<synchronous>, transform_indices = @transform_2, window_bounds = array<i64: 2, 128, 256>}]} {
    %c0 = arith.constant 0 : index
    %c0_0 = arith.constant 0 : index
    %c0_1 = arith.constant 0 : index
    %0 = vector.load %arg1[%c0, %c0_0, %c0_1] : memref<2x8x290xf32, #tpu.memory_space<vmem>>, vector<1x8x290xf32>
    %1 = vector.shape_cast %0 : vector<1x8x290xf32> to vector<8x290xf32>
    %2 = vector.extract_strided_slice %1 {offsets = [0, 0], sizes = [8, 256], strides = [1, 1]} : vector<8x290xf32> to vector<8x256xf32>
    %3 = vector.extract_strided_slice %1 {offsets = [0, 1], sizes = [8, 256], strides = [1, 1]} : vector<8x290xf32> to vector<8x256xf32>
    %4 = vector.extract_strided_slice %1 {offsets = [0, 2], sizes = [8, 256], strides = [1, 1]} : vector<8x290xf32> to vector<8x256xf32>
    %5 = vector.extract_strided_slice %1 {offsets = [0, 16], sizes = [8, 256], strides = [1, 1]} : vector<8x290xf32> to vector<8x256xf32>
    %6 = vector.extract_strided_slice %1 {offsets = [0, 17], sizes = [8, 256], strides = [1, 1]} : vector<8x290xf32> to vector<8x256xf32>
    %7 = vector.extract_strided_slice %1 {offsets = [0, 18], sizes = [8, 256], strides = [1, 1]} : vector<8x290xf32> to vector<8x256xf32>
    %8 = vector.extract_strided_slice %1 {offsets = [0, 32], sizes = [8, 256], strides = [1, 1]} : vector<8x290xf32> to vector<8x256xf32>
    %9 = vector.extract_strided_slice %1 {offsets = [0, 33], sizes = [8, 256], strides = [1, 1]} : vector<8x290xf32> to vector<8x256xf32>
    %10 = vector.extract_strided_slice %1 {offsets = [0, 34], sizes = [8, 256], strides = [1, 1]} : vector<8x290xf32> to vector<8x256xf32>
    %11 = tpu.iota {dimensions = array<i32: 0>} : vector<8x256xi32>
    %c0_i32 = arith.constant 0 : i32
    %12 = vector.broadcast %c0_i32 : i32 to vector<8x256xi32>
    %13 = arith.cmpi eq, %11, %12 : vector<8x256xi32>
    %14 = arith.extui %13 : vector<8x256xi1> to vector<8x256xi32>
    %15 = arith.sitofp %14 : vector<8x256xi32> to vector<8x256xf32>
    %16 = tpu.concatenate %2, %3, %4, %5, %6, %7, %8, %9, %10, %15 in 0 : vector<8x256xf32>, vector<8x256xf32>, vector<8x256xf32>, vector<8x256xf32>, vector<8x256xf32>, vector<8x256xf32>, vector<8x256xf32>, vector<8x256xf32>, vector<8x256xf32>, vector<8x256xf32> -> vector<80x256xf32>
    %c1 = arith.constant 1 : index
    %c0_2 = arith.constant 0 : index
    %c0_3 = arith.constant 0 : index
    %17 = vector.load %arg1[%c1, %c0_2, %c0_3] : memref<2x8x290xf32, #tpu.memory_space<vmem>>, vector<1x8x290xf32>
    %18 = vector.shape_cast %17 : vector<1x8x290xf32> to vector<8x290xf32>
    %19 = vector.extract_strided_slice %18 {offsets = [0, 0], sizes = [8, 256], strides = [1, 1]} : vector<8x290xf32> to vector<8x256xf32>
    %20 = vector.extract_strided_slice %18 {offsets = [0, 1], sizes = [8, 256], strides = [1, 1]} : vector<8x290xf32> to vector<8x256xf32>
    %21 = vector.extract_strided_slice %18 {offsets = [0, 2], sizes = [8, 256], strides = [1, 1]} : vector<8x290xf32> to vector<8x256xf32>
    %22 = vector.extract_strided_slice %18 {offsets = [0, 16], sizes = [8, 256], strides = [1, 1]} : vector<8x290xf32> to vector<8x256xf32>
    %23 = vector.extract_strided_slice %18 {offsets = [0, 17], sizes = [8, 256], strides = [1, 1]} : vector<8x290xf32> to vector<8x256xf32>
    %24 = vector.extract_strided_slice %18 {offsets = [0, 18], sizes = [8, 256], strides = [1, 1]} : vector<8x290xf32> to vector<8x256xf32>
    %25 = vector.extract_strided_slice %18 {offsets = [0, 32], sizes = [8, 256], strides = [1, 1]} : vector<8x290xf32> to vector<8x256xf32>
    %26 = vector.extract_strided_slice %18 {offsets = [0, 33], sizes = [8, 256], strides = [1, 1]} : vector<8x290xf32> to vector<8x256xf32>
    %27 = vector.extract_strided_slice %18 {offsets = [0, 34], sizes = [8, 256], strides = [1, 1]} : vector<8x290xf32> to vector<8x256xf32>
    %28 = tpu.iota {dimensions = array<i32: 0>} : vector<8x256xi32>
    %c0_i32_4 = arith.constant 0 : i32
    %29 = vector.broadcast %c0_i32_4 : i32 to vector<8x256xi32>
    %30 = arith.cmpi eq, %28, %29 : vector<8x256xi32>
    %31 = arith.extui %30 : vector<8x256xi1> to vector<8x256xi32>
    %32 = arith.sitofp %31 : vector<8x256xi32> to vector<8x256xf32>
    %33 = tpu.concatenate %19, %20, %21, %22, %23, %24, %25, %26, %27, %32 in 0 : vector<8x256xf32>, vector<8x256xf32>, vector<8x256xf32>, vector<8x256xf32>, vector<8x256xf32>, vector<8x256xf32>, vector<8x256xf32>, vector<8x256xf32>, vector<8x256xf32>, vector<8x256xf32> -> vector<80x256xf32>
    %34 = tpu.concatenate %16, %33 in 1 : vector<80x256xf32>, vector<80x256xf32> -> vector<80x512xf32>
    %c0_5 = arith.constant 0 : index
    %c0_6 = arith.constant 0 : index
    %35 = vector.load %arg2[%c0_5, %c0_6] : memref<128x80xf32, #tpu.memory_space<vmem>>, vector<128x80xf32>
    %cst = arith.constant dense<0.000000e+00> : vector<128x512xf32>
    %36 = tpu.matmul %35, %34, %cst {dimension_numbers = #tpu.dot_dimension_numbers<[1], [0], [0], [1], [0, 0, 1, 1], [], []>} : vector<128x80xf32>, vector<80x512xf32>, vector<128x512xf32> -> vector<128x512xf32>
    %37 = vector.extract_strided_slice %36 {offsets = [0, 0], sizes = [128, 256], strides = [1, 1]} : vector<128x512xf32> to vector<128x256xf32>
    %c0_7 = arith.constant 0 : index
    %c0_8 = arith.constant 0 : index
    %c0_9 = arith.constant 0 : index
    %38 = vector.load %arg3[%c0_7, %c0_8, %c0_9] : memref<2x128x256xf32, #tpu.memory_space<vmem>>, vector<1x128x256xf32>
    %39 = vector.shape_cast %38 : vector<1x128x256xf32> to vector<128x256xf32>
    %40 = vector.shape_cast %37 : vector<128x256xf32> to vector<1x128x256xf32>
    tpu.vector_store %arg3[%c0_7, %c0_8, %c0_9], %40 {strides = array<i32>} : memref<2x128x256xf32, #tpu.memory_space<vmem>>, vector<1x128x256xf32>,
    %41 = vector.extract_strided_slice %36 {offsets = [0, 256], sizes = [128, 256], strides = [1, 1]} : vector<128x512xf32> to vector<128x256xf32>
    %c1_10 = arith.constant 1 : index
    %c0_11 = arith.constant 0 : index
    %c0_12 = arith.constant 0 : index
    %42 = vector.load %arg3[%c1_10, %c0_11, %c0_12] : memref<2x128x256xf32, #tpu.memory_space<vmem>>, vector<1x128x256xf32>
    %43 = vector.shape_cast %42 : vector<1x128x256xf32> to vector<128x256xf32>
    %44 = vector.shape_cast %41 : vector<128x256xf32> to vector<1x128x256xf32>
    tpu.vector_store %arg3[%c1_10, %c0_11, %c0_12], %44 {strides = array<i32>} : memref<2x128x256xf32, #tpu.memory_space<vmem>>, vector<1x128x256xf32>,
    return
  }
  func.func @transform_0(%arg0: i32) -> (i32, i32, i32) {
    %c0_i32 = arith.constant 0 : i32
    %c0_i32_0 = arith.constant 0 : i32
    %c0_i32_1 = arith.constant 0 : i32
    %c0_i32_2 = arith.constant 0 : i32
    return %c0_i32, %c0_i32_0, %c0_i32_1 : i32, i32, i32
  }
  func.func @transform_1(%arg0: i32) -> (i32, i32) {
    %c0_i32 = arith.constant 0 : i32
    %c0_i32_0 = arith.constant 0 : i32
    %c0_i32_1 = arith.constant 0 : i32
    return %c0_i32, %c0_i32_0 : i32, i32
  }
  func.func @transform_2(%arg0: i32) -> (i32, i32, i32) {
    %c0_i32 = arith.constant 0 : i32
    %c0_i32_0 = arith.constant 0 : i32
    %c0_i32_1 = arith.constant 0 : i32
    %c0_i32_2 = arith.constant 0 : i32
    return %c0_i32, %c0_i32_0, %c0_i32_1 : i32, i32, i32
  }
}

</mosaic_0001>

<llo_original>
// kernel: conv2d_pallas.1
$region0: #{conv2d_pallas.1}
  #allocation0 [shape = 'u32[]', space=smem, size = 0x4, offset = 0x4, fixed_abs, tag = 'smem constant byte address 0x4 - core index']
  #allocation1 [shape = 'u32[144,128]{1,0:T(1,128)}', space=vmem, size = 0x12000, scoped, tag = 'internal scratch']
  %s0 = inlined_call_operand.vmem [shape: f32[2,8,290], index: 0, kind: input, shape index: {}]
  %s1 = inlined_call_operand.vmem [shape: f32[128,80], index: 1, kind: input, shape index: {}]
  %s2 = inlined_call_operand.vmem [shape: f32[2,128,256], index: 2, kind: output, shape index: {}]
  %s3 = sld [smem:[#allocation0]]
  $region18: #{conv2d_pallas.1} parent=0
    _
  %s5 = ssub.s32 1, %s3
  %s6 = scalar_select 0, %s5, %s3
  // Predicated region
  $region2: #{conv2d_pallas.1} parent=0 // pred_check
    _
  $region3: #{conv2d_pallas.1} parent=0 // pred_check_branch
    %8 = sbr.rel (0) target = $region5
  $region4: #{conv2d_pallas.1} parent=0 // pred_region
    _
  $region5: #{conv2d_pallas.1} parent=0 // pred_fallthru
    _
  // Predicated region
  $region6: #{conv2d_pallas.1} parent=0 // pred_check
    _
  $region7: #{conv2d_pallas.1} parent=0 // pred_check_branch
    %10 = sbr.rel (0) target = $region9
  $region8: #{conv2d_pallas.1} parent=0 // pred_region
    _
  $region9: #{conv2d_pallas.1} parent=0 // pred_fallthru
    _
  %v11 = vld [vmem:[%s0] sm:$0xff]
  %v12 = vld [vmem:[%s0 + $0x8] sm:$0xff]
  %v13 = vld [vmem:[%s0 + $0x10] sm:$0xff]
  %v14 = vlaneseq
  %v15 = vshrl.u32 %v14, 7
  %vm16 = vcmp.eq.s32.totalorder %v15, 0
  %v17 = vsel %vm16, 1, 0
  %v18 = vcvt.s32.f32 %v17
  %22 = vrot.lane.b32.xlu0 %v11, 127
  %v23 = vpop.permute.xlu0 %22
  %24 = vrot.lane.b32.xlu0 %v12, 127
  %v25 = vpop.permute.xlu0 %24
  %26 = vrot.lane.b32.xlu0 %v13, 127
  %v27 = vpop.permute.xlu0 %26
  %vm28 = vcmask 1039360
  %v29 = vsel %vm28, %v23, %v25
  %v30 = vsel %vm28, %v25, %v27
  %33 = vrot.lane.b32.xlu0 %v11, 126
  %v34 = vpop.permute.xlu0 %33
  %35 = vrot.lane.b32.xlu0 %v12, 126
  %v36 = vpop.permute.xlu0 %35
  %37 = vrot.lane.b32.xlu0 %v13, 126
  %v38 = vpop.permute.xlu0 %37
  %vm39 = vcmask 1031168
  %v40 = vsel %vm39, %v34, %v36
  %v41 = vsel %vm39, %v36, %v38
  %44 = vrot.lane.b32.xlu0 %v11, 112
  %v45 = vpop.permute.xlu0 %44
  %46 = vrot.lane.b32.xlu0 %v12, 112
  %v47 = vpop.permute.xlu0 %46
  %48 = vrot.lane.b32.xlu0 %v13, 112
  %v49 = vpop.permute.xlu0 %48
  %vm50 = vcmask 916480
  %v51 = vsel %vm50, %v45, %v47
  %v52 = vsel %vm50, %v47, %v49
  %55 = vrot.lane.b32.xlu0 %v11, 111
  %v56 = vpop.permute.xlu0 %55
  %57 = vrot.lane.b32.xlu0 %v12, 111
  %v58 = vpop.permute.xlu0 %57
  %59 = vrot.lane.b32.xlu0 %v13, 111
  %v60 = vpop.permute.xlu0 %59
  %vm61 = vcmask 908288
  %v62 = vsel %vm61, %v56, %v58
  %v63 = vsel %vm61, %v58, %v60
  %66 = vrot.lane.b32.xlu0 %v11, 110
  %v67 = vpop.permute.xlu0 %66
  %68 = vrot.lane.b32.xlu0 %v12, 110
  %v69 = vpop.permute.xlu0 %68
  %70 = vrot.lane.b32.xlu0 %v13, 110
  %v71 = vpop.permute.xlu0 %70
  %vm72 = vcmask 900096
  %v73 = vsel %vm72, %v67, %v69
  %v74 = vsel %vm72, %v69, %v71
  %77 = vrot.lane.b32.xlu0 %v11, 96
  %v78 = vpop.permute.xlu0 %77
  %79 = vrot.lane.b32.xlu0 %v12, 96
  %v80 = vpop.permute.xlu0 %79
  %81 = vrot.lane.b32.xlu0 %v13, 96
  %v82 = vpop.permute.xlu0 %81
  %vm83 = vcmask 785408
  %v84 = vsel %vm83, %v78, %v80
  %v85 = vsel %vm83, %v80, %v82
  %88 = vrot.lane.b32.xlu0 %v11, 95
  %v89 = vpop.permute.xlu0 %88
  %90 = vrot.lane.b32.xlu0 %v12, 95
  %v91 = vpop.permute.xlu0 %90
  %92 = vrot.lane.b32.xlu0 %v13, 95
  %v93 = vpop.permute.xlu0 %92
  %vm94 = vcmask 777216
  %v95 = vsel %vm94, %v89, %v91
  %v96 = vsel %vm94, %v91, %v93
  %99 = vrot.lane.b32.xlu0 %v11, 94
  %v100 = vpop.permute.xlu0 %99
  %101 = vrot.lane.b32.xlu0 %v12, 94
  %v102 = vpop.permute.xlu0 %101
  %103 = vrot.lane.b32.xlu0 %v13, 94
  %v104 = vpop.permute.xlu0 %103
  %vm105 = vcmask 769024
  %v106 = vsel %vm105, %v100, %v102
  %v107 = vsel %vm105, %v102, %v104
  %s110 = scalar_lea.vmem %s0, 24
  %v111 = vld [vmem:[%s110] sm:$0xff]
  %v112 = vld [vmem:[%s110 + $0x8] sm:$0xff]
  %v113 = vld [vmem:[%s110 + $0x10] sm:$0xff]
  %117 = vrot.lane.b32.xlu0 %v111, 127
  %v118 = vpop.permute.xlu0 %117
  %119 = vrot.lane.b32.xlu0 %v112, 127
  %v120 = vpop.permute.xlu0 %119
  %121 = vrot.lane.b32.xlu0 %v113, 127
  %v122 = vpop.permute.xlu0 %121
  %v123 = vsel %vm28, %v118, %v120
  %v124 = vsel %vm28, %v120, %v122
  %127 = vrot.lane.b32.xlu0 %v111, 126
  %v128 = vpop.permute.xlu0 %127
  %129 = vrot.lane.b32.xlu0 %v112, 126
  %v130 = vpop.permute.xlu0 %129
  %131 = vrot.lane.b32.xlu0 %v113, 126
  %v132 = vpop.permute.xlu0 %131
  %v133 = vsel %vm39, %v128, %v130
  %v134 = vsel %vm39, %v130, %v132
  %137 = vrot.lane.b32.xlu0 %v111, 112
  %v138 = vpop.permute.xlu0 %137
  %139 = vrot.lane.b32.xlu0 %v112, 112
  %v140 = vpop.permute.xlu0 %139
  %141 = vrot.lane.b32.xlu0 %v113, 112
  %v142 = vpop.permute.xlu0 %141
  %v143 = vsel %vm50, %v138, %v140
  %v144 = vsel %vm50, %v140, %v142
  %147 = vrot.lane.b32.xlu0 %v111, 111
  %v148 = vpop.permute.xlu0 %147
  %149 = vrot.lane.b32.xlu0 %v112, 111
  %v150 = vpop.permute.xlu0 %149
  %151 = vrot.lane.b32.xlu0 %v113, 111
  %v152 = vpop.permute.xlu0 %151
  %v153 = vsel %vm61, %v148, %v150
  %v154 = vsel %vm61, %v150, %v152
  %157 = vrot.lane.b32.xlu0 %v111, 110
  %v158 = vpop.permute.xlu0 %157
  %159 = vrot.lane.b32.xlu0 %v112, 110
  %v160 = vpop.permute.xlu0 %159
  %161 = vrot.lane.b32.xlu0 %v113, 110
  %v162 = vpop.permute.xlu0 %161
  %v163 = vsel %vm72, %v158, %v160
  %v164 = vsel %vm72, %v160, %v162
  %167 = vrot.lane.b32.xlu0 %v111, 96
  %v168 = vpop.permute.xlu0 %167
  %169 = vrot.lane.b32.xlu0 %v112, 96
  %v170 = vpop.permute.xlu0 %169
  %171 = vrot.lane.b32.xlu0 %v113, 96
  %v172 = vpop.permute.xlu0 %171
  %v173 = vsel %vm83, %v168, %v170
  %v174 = vsel %vm83, %v170, %v172
  %177 = vrot.lane.b32.xlu0 %v111, 95
  %v178 = vpop.permute.xlu0 %177
  %179 = vrot.lane.b32.xlu0 %v112, 95
  %v180 = vpop.permute.xlu0 %179
  %181 = vrot.lane.b32.xlu0 %v113, 95
  %v182 = vpop.permute.xlu0 %181
  %v183 = vsel %vm94, %v178, %v180
  %v184 = vsel %vm94, %v180, %v182
  %187 = vrot.lane.b32.xlu0 %v111, 94
  %v188 = vpop.permute.xlu0 %187
  %189 = vrot.lane.b32.xlu0 %v112, 94
  %v190 = vpop.permute.xlu0 %189
  %191 = vrot.lane.b32.xlu0 %v113, 94
  %v192 = vpop.permute.xlu0 %191
  %v193 = vsel %vm105, %v188, %v190
  %v194 = vsel %vm105, %v190, %v192
  %v197 = vld [vmem:[%s1] sm:$0xff]
  %v198 = vld [vmem:[%s1 + $0x8] sm:$0xff]
  %v199 = vld [vmem:[%s1 + $0x10] sm:$0xff]
  %v200 = vld [vmem:[%s1 + $0x18] sm:$0xff]
  %v201 = vld [vmem:[%s1 + $0x20] sm:$0xff]
  %v202 = vld [vmem:[%s1 + $0x28] sm:$0xff]
  %v203 = vld [vmem:[%s1 + $0x30] sm:$0xff]
  %v204 = vld [vmem:[%s1 + $0x38] sm:$0xff]
  %v205 = vld [vmem:[%s1 + $0x40] sm:$0xff]
  %v206 = vld [vmem:[%s1 + $0x48] sm:$0xff]
  %v207 = vld [vmem:[%s1 + $0x50] sm:$0xff]
  %v208 = vld [vmem:[%s1 + $0x58] sm:$0xff]
  %v209 = vld [vmem:[%s1 + $0x60] sm:$0xff]
  %v210 = vld [vmem:[%s1 + $0x68] sm:$0xff]
  %v211 = vld [vmem:[%s1 + $0x70] sm:$0xff]
  %v212 = vld [vmem:[%s1 + $0x78] sm:$0xff]
  %vm213 = vcmask 654336
  %v215 = vsel %vm213, %v197, 0
  %v218 = vsel %vm213, %v198, 0
  %v221 = vsel %vm213, %v199, 0
  %v224 = vsel %vm213, %v200, 0
  %v227 = vsel %vm213, %v201, 0
  %v230 = vsel %vm213, %v202, 0
  %v233 = vsel %vm213, %v203, 0
  %v236 = vsel %vm213, %v204, 0
  %v239 = vsel %vm213, %v205, 0
  %v242 = vsel %vm213, %v206, 0
  %v245 = vsel %vm213, %v207, 0
  %v248 = vsel %vm213, %v208, 0
  %v251 = vsel %vm213, %v209, 0
  %v254 = vsel %vm213, %v210, 0
  %v257 = vsel %vm213, %v211, 0
  %v260 = vsel %vm213, %v212, 0
  %262 = vmatprep.subr.mxu0 %v12
  %263 = vmatpush1.msra.mxu0 %v11
  %264 = vmatprep.subr.mxu0 %v30
  %265 = vmatpush1.msra.mxu0 %v29
  %266 = vmatprep.subr.mxu0 %v41
  %267 = vmatpush1.msra.mxu0 %v40
  %268 = vmatprep.subr.mxu0 %v52
  %269 = vmatpush1.msra.mxu0 %v51
  %270 = vmatprep.subr.mxu0 %v63
  %271 = vmatpush1.msra.mxu0 %v62
  %272 = vmatprep.subr.mxu0 %v74
  %273 = vmatpush1.msra.mxu0 %v73
  %274 = vmatprep.subr.mxu0 %v85
  %275 = vmatpush1.msra.mxu0 %v84
  %276 = vmatprep.subr.mxu0 %v96
  %277 = vmatpush1.msra.mxu0 %v95
  %278 = vmatprep.subr.mxu0 %v107
  %279 = vmatpush1.msra.mxu0 %v106
  %280 = vmatprep.subr.mxu0 %v18
  %281 = vmatpush1.msra.mxu0 %v18
  %282 = vmatprep.subr.mxu0 0.0
  %283 = vmatpush1.msra.mxu0 0.0
  %284 = vmatprep.subr.mxu0 0.0
  %285 = vmatpush1.msra.mxu0 0.0
  %286 = vmatprep.subr.mxu0 0.0
  %287 = vmatpush1.msra.mxu0 0.0
  %288 = vmatprep.subr.mxu0 0.0
  %289 = vmatpush1.msra.mxu0 0.0
  %290 = vmatprep.subr.mxu0 0.0
  %291 = vmatpush1.msra.mxu0 0.0
  %292 = vmatprep.subr.mxu0 0.0
  %293 = vmatpush1.msra.mxu0 0.0
  %294 = vmatprep.subr.mxu0 0.0
  %295 = vmatpush1.msra.mxu0 0.0
  %296 = vmatprep.subr.mxu0 0.0
  %297 = vmatpush1.msra.mxu0 0.0
  %298 = vmatprep.subr.mxu0 0.0
  %299 = vmatpush1.msra.mxu0 0.0
  %300 = vmatprep.subr.mxu0 0.0
  %301 = vmatpush1.msra.mxu0 0.0
  %302 = vmatprep.subr.mxu0 0.0
  %303 = vmatpush1.msra.mxu0 0.0
  %304 = vmatprep.subr.mxu0 0.0
  %305 = vmatpush1.msra.mxu0 0.0
  %306 = vmatprep.subr.mxu0 0.0
  %307 = vmatpush1.msra.mxu0 0.0
  %308 = vmatprep.subr.mxu0 0.0
  %309 = vmatpush1.msra.mxu0 0.0
  %310 = vmatprep.subr.mxu0 0.0
  %311 = vmatpush1.msra.mxu0 0.0
  %312 = vmatprep.subr.mxu0 0.0
  %313 = vmatpush1.msra.mxu0 0.0
  %314 = vmatprep.subr.mxu0 0.0
  %315 = vmatpush1.msra.mxu0 0.0
  %316 = vmatprep.subr.mxu0 0.0
  %317 = vmatpush1.msra.mxu0 0.0
  %318 = vmatprep.subr.mxu0 0.0
  %319 = vmatpush1.msra.mxu0 0.0
  %320 = vmatprep.subr.mxu0 0.0
  %321 = vmatpush1.msra.mxu0 0.0
  %322 = vmatprep.subr.mxu0 0.0
  %323 = vmatpush1.msra.mxu0 0.0
  %324 = vmatprep.subr.mxu0 0.0
  %325 = vmatpush1.msra.mxu0 0.0
  %326 = vmatprep.mubr.f32.mxu0 0.0
  %327 = vmatmul.mubr.f32.gmra.mrb[0].mxu0 %v215
  %v328 = vpop.f32.mrb[0].mxu0
  %v329 = vadd.f32 0.0, %v328
  %v330 = vpop.f32.mrb[0].mxu0
  %v331 = vadd.f32 0.0, %v330
  %332 = vmatprep.mubr.f32.mxu0 0.0
  %333 = vmatmul.mubr.f32.gmra.mrb[0].mxu0 %v218
  %v334 = vpop.f32.mrb[0].mxu0
  %v335 = vadd.f32 0.0, %v334
  %v336 = vpop.f32.mrb[0].mxu0
  %v337 = vadd.f32 0.0, %v336
  %338 = vmatprep.mubr.f32.mxu0 0.0
  %339 = vmatmul.mubr.f32.gmra.mrb[0].mxu0 %v221
  %v340 = vpop.f32.mrb[0].mxu0
  %v341 = vadd.f32 0.0, %v340
  %v342 = vpop.f32.mrb[0].mxu0
  %v343 = vadd.f32 0.0, %v342
  %344 = vmatprep.mubr.f32.mxu0 0.0
  %345 = vmatmul.mubr.f32.gmra.mrb[0].mxu0 %v224
  %v346 = vpop.f32.mrb[0].mxu0
  %v347 = vadd.f32 0.0, %v346
  %v348 = vpop.f32.mrb[0].mxu0
  %v349 = vadd.f32 0.0, %v348
  %350 = vmatprep.mubr.f32.mxu0 0.0
  %351 = vmatmul.mubr.f32.gmra.mrb[0].mxu0 %v227
  %v352 = vpop.f32.mrb[0].mxu0
  %v353 = vadd.f32 0.0, %v352
  %v354 = vpop.f32.mrb[0].mxu0
  %v355 = vadd.f32 0.0, %v354
  %356 = vmatprep.mubr.f32.mxu0 0.0
  %357 = vmatmul.mubr.f32.gmra.mrb[0].mxu0 %v230
  %v358 = vpop.f32.mrb[0].mxu0
  %v359 = vadd.f32 0.0, %v358
  %v360 = vpop.f32.mrb[0].mxu0
  %v361 = vadd.f32 0.0, %v360
  %362 = vmatprep.mubr.f32.mxu0 0.0
  %363 = vmatmul.mubr.f32.gmra.mrb[0].mxu0 %v233
  %v364 = vpop.f32.mrb[0].mxu0
  %v365 = vadd.f32 0.0, %v364
  %v366 = vpop.f32.mrb[0].mxu0
  %v367 = vadd.f32 0.0, %v366
  %368 = vmatprep.mubr.f32.mxu0 0.0
  %369 = vmatmul.mubr.f32.gmra.mrb[0].mxu0 %v236
  %v370 = vpop.f32.mrb[0].mxu0
  %v371 = vadd.f32 0.0, %v370
  %v372 = vpop.f32.mrb[0].mxu0
  %v373 = vadd.f32 0.0, %v372
  %374 = vmatprep.mubr.f32.mxu0 0.0
  %375 = vmatmul.mubr.f32.gmra.mrb[0].mxu0 %v239
  %v376 = vpop.f32.mrb[0].mxu0
  %v377 = vadd.f32 0.0, %v376
  %v378 = vpop.f32.mrb[0].mxu0
  %v379 = vadd.f32 0.0, %v378
  %380 = vmatprep.mubr.f32.mxu0 0.0
  %381 = vmatmul.mubr.f32.gmra.mrb[0].mxu0 %v242
  %v382 = vpop.f32.mrb[0].mxu0
  %v383 = vadd.f32 0.0, %v382
  %v384 = vpop.f32.mrb[0].mxu0
  %v385 = vadd.f32 0.0, %v384
  %386 = vmatprep.mubr.f32.mxu0 0.0
  %387 = vmatmul.mubr.f32.gmra.mrb[0].mxu0 %v245
  %v388 = vpop.f32.mrb[0].mxu0
  %v389 = vadd.f32 0.0, %v388
  %v390 = vpop.f32.mrb[0].mxu0
  %v391 = vadd.f32 0.0, %v390
  %392 = vmatprep.mubr.f32.mxu0 0.0
  %393 = vmatmul.mubr.f32.gmra.mrb[0].mxu0 %v248
  %v394 = vpop.f32.mrb[0].mxu0
  %v395 = vadd.f32 0.0, %v394
  %v396 = vpop.f32.mrb[0].mxu0
  %v397 = vadd.f32 0.0, %v396
  %398 = vmatprep.mubr.f32.mxu0 0.0
  %399 = vmatmul.mubr.f32.gmra.mrb[0].mxu0 %v251
  %v400 = vpop.f32.mrb[0].mxu0
  %v401 = vadd.f32 0.0, %v400
  %v402 = vpop.f32.mrb[0].mxu0
  %v403 = vadd.f32 0.0, %v402
  %404 = vmatprep.mubr.f32.mxu0 0.0
  %405 = vmatmul.mubr.f32.gmra.mrb[0].mxu0 %v254
  %v406 = vpop.f32.mrb[0].mxu0
  %v407 = vadd.f32 0.0, %v406
  %v408 = vpop.f32.mrb[0].mxu0
  %v409 = vadd.f32 0.0, %v408
  %410 = vmatprep.mubr.f32.mxu0 0.0
  %411 = vmatmul.mubr.f32.gmra.mrb[0].mxu0 %v257
  %v412 = vpop.f32.mrb[0].mxu0
  %v413 = vadd.f32 0.0, %v412
  %v414 = vpop.f32.mrb[0].mxu0
  %v415 = vadd.f32 0.0, %v414
  %416 = vmatprep.mubr.f32.mxu0 0.0
  %417 = vmatmul.mubr.f32.gmra.mrb[0].mxu0 %v260
  %v418 = vpop.f32.mrb[0].mxu0
  %v419 = vadd.f32 0.0, %v418
  %v420 = vpop.f32.mrb[0].mxu0
  %v421 = vadd.f32 0.0, %v420
  %422 = vdwg.mxu0
  %423 = vmatprep.subr.mxu0 %v112
  %424 = vmatpush1.msra.mxu0 %v111
  %425 = vmatprep.subr.mxu0 %v124
  %426 = vmatpush1.msra.mxu0 %v123
  %427 = vmatprep.subr.mxu0 %v134
  %428 = vmatpush1.msra.mxu0 %v133
  %429 = vmatprep.subr.mxu0 %v144
  %430 = vmatpush1.msra.mxu0 %v143
  %431 = vmatprep.subr.mxu0 %v154
  %432 = vmatpush1.msra.mxu0 %v153
  %433 = vmatprep.subr.mxu0 %v164
  %434 = vmatpush1.msra.mxu0 %v163
  %435 = vmatprep.subr.mxu0 %v174
  %436 = vmatpush1.msra.mxu0 %v173
  %437 = vmatprep.subr.mxu0 %v184
  %438 = vmatpush1.msra.mxu0 %v183
  %439 = vmatprep.subr.mxu0 %v194
  %440 = vmatpush1.msra.mxu0 %v193
  %441 = vmatprep.subr.mxu0 %v18
  %442 = vmatpush1.msra.mxu0 %v18
  %443 = vmatprep.subr.mxu0 0.0
  %444 = vmatpush1.msra.mxu0 0.0
  %445 = vmatprep.subr.mxu0 0.0
  %446 = vmatpush1.msra.mxu0 0.0
  %447 = vmatprep.subr.mxu0 0.0
  %448 = vmatpush1.msra.mxu0 0.0
  %449 = vmatprep.subr.mxu0 0.0
  %450 = vmatpush1.msra.mxu0 0.0
  %451 = vmatprep.subr.mxu0 0.0
  %452 = vmatpush1.msra.mxu0 0.0
  %453 = vmatprep.subr.mxu0 0.0
  %454 = vmatpush1.msra.mxu0 0.0
  %455 = vmatprep.subr.mxu0 0.0
  %456 = vmatpush1.msra.mxu0 0.0
  %457 = vmatprep.subr.mxu0 0.0
  %458 = vmatpush1.msra.mxu0 0.0
  %459 = vmatprep.subr.mxu0 0.0
  %460 = vmatpush1.msra.mxu0 0.0
  %461 = vmatprep.subr.mxu0 0.0
  %462 = vmatpush1.msra.mxu0 0.0
  %463 = vmatprep.subr.mxu0 0.0
  %464 = vmatpush1.msra.mxu0 0.0
  %465 = vmatprep.subr.mxu0 0.0
  %466 = vmatpush1.msra.mxu0 0.0
  %467 = vmatprep.subr.mxu0 0.0
  %468 = vmatpush1.msra.mxu0 0.0
  %469 = vmatprep.subr.mxu0 0.0
  %470 = vmatpush1.msra.mxu0 0.0
  %471 = vmatprep.subr.mxu0 0.0
  %472 = vmatpush1.msra.mxu0 0.0
  %473 = vmatprep.subr.mxu0 0.0
  %474 = vmatpush1.msra.mxu0 0.0
  %475 = vmatprep.subr.mxu0 0.0
  %476 = vmatpush1.msra.mxu0 0.0
  %477 = vmatprep.subr.mxu0 0.0
  %478 = vmatpush1.msra.mxu0 0.0
  %479 = vmatprep.subr.mxu0 0.0
  %480 = vmatpush1.msra.mxu0 0.0
  %481 = vmatprep.subr.mxu0 0.0
  %482 = vmatpush1.msra.mxu0 0.0
  %483 = vmatprep.subr.mxu0 0.0
  %484 = vmatpush1.msra.mxu0 0.0
  %485 = vmatprep.subr.mxu0 0.0
  %486 = vmatpush1.msra.mxu0 0.0
  %487 = vmatprep.mubr.f32.mxu0 0.0
  %488 = vmatmul.mubr.f32.gmra.mrb[0].mxu0 %v215
  %v489 = vpop.f32.mrb[0].mxu0
  %v490 = vadd.f32 0.0, %v489
  %v491 = vpop.f32.mrb[0].mxu0
  %v492 = vadd.f32 0.0, %v491
  %493 = vmatprep.mubr.f32.mxu0 0.0
  %494 = vmatmul.mubr.f32.gmra.mrb[0].mxu0 %v218
  %v495 = vpop.f32.mrb[0].mxu0
  %v496 = vadd.f32 0.0, %v495
  %v497 = vpop.f32.mrb[0].mxu0
  %v498 = vadd.f32 0.0, %v497
  %499 = vmatprep.mubr.f32.mxu0 0.0
  %500 = vmatmul.mubr.f32.gmra.mrb[0].mxu0 %v221
  %v501 = vpop.f32.mrb[0].mxu0
  %v502 = vadd.f32 0.0, %v501
  %v503 = vpop.f32.mrb[0].mxu0
  %v504 = vadd.f32 0.0, %v503
  %505 = vmatprep.mubr.f32.mxu0 0.0
  %506 = vmatmul.mubr.f32.gmra.mrb[0].mxu0 %v224
  %v507 = vpop.f32.mrb[0].mxu0
  %v508 = vadd.f32 0.0, %v507
  %v509 = vpop.f32.mrb[0].mxu0
  %v510 = vadd.f32 0.0, %v509
  %511 = vmatprep.mubr.f32.mxu0 0.0
  %512 = vmatmul.mubr.f32.gmra.mrb[0].mxu0 %v227
  %v513 = vpop.f32.mrb[0].mxu0
  %v514 = vadd.f32 0.0, %v513
  %v515 = vpop.f32.mrb[0].mxu0
  %v516 = vadd.f32 0.0, %v515
  %517 = vmatprep.mubr.f32.mxu0 0.0
  %518 = vmatmul.mubr.f32.gmra.mrb[0].mxu0 %v230
  %v519 = vpop.f32.mrb[0].mxu0
  %v520 = vadd.f32 0.0, %v519
  %v521 = vpop.f32.mrb[0].mxu0
  %v522 = vadd.f32 0.0, %v521
  %523 = vmatprep.mubr.f32.mxu0 0.0
  %524 = vmatmul.mubr.f32.gmra.mrb[0].mxu0 %v233
  %v525 = vpop.f32.mrb[0].mxu0
  %v526 = vadd.f32 0.0, %v525
  %v527 = vpop.f32.mrb[0].mxu0
  %v528 = vadd.f32 0.0, %v527
  %529 = vmatprep.mubr.f32.mxu0 0.0
  %530 = vmatmul.mubr.f32.gmra.mrb[0].mxu0 %v236
  %v531 = vpop.f32.mrb[0].mxu0
  %v532 = vadd.f32 0.0, %v531
  %v533 = vpop.f32.mrb[0].mxu0
  %v534 = vadd.f32 0.0, %v533
  %535 = vmatprep.mubr.f32.mxu0 0.0
  %536 = vmatmul.mubr.f32.gmra.mrb[0].mxu0 %v239
  %v537 = vpop.f32.mrb[0].mxu0
  %v538 = vadd.f32 0.0, %v537
  %v539 = vpop.f32.mrb[0].mxu0
  %v540 = vadd.f32 0.0, %v539
  %541 = vmatprep.mubr.f32.mxu0 0.0
  %542 = vmatmul.mubr.f32.gmra.mrb[0].mxu0 %v242
  %v543 = vpop.f32.mrb[0].mxu0
  %v544 = vadd.f32 0.0, %v543
  %v545 = vpop.f32.mrb[0].mxu0
  %v546 = vadd.f32 0.0, %v545
  %547 = vmatprep.mubr.f32.mxu0 0.0
  %548 = vmatmul.mubr.f32.gmra.mrb[0].mxu0 %v245
  %v549 = vpop.f32.mrb[0].mxu0
  %v550 = vadd.f32 0.0, %v549
  %v551 = vpop.f32.mrb[0].mxu0
  %v552 = vadd.f32 0.0, %v551
  %553 = vmatprep.mubr.f32.mxu0 0.0
  %554 = vmatmul.mubr.f32.gmra.mrb[0].mxu0 %v248
  %v555 = vpop.f32.mrb[0].mxu0
  %v556 = vadd.f32 0.0, %v555
  %v557 = vpop.f32.mrb[0].mxu0
  %v558 = vadd.f32 0.0, %v557
  %559 = vmatprep.mubr.f32.mxu0 0.0
  %560 = vmatmul.mubr.f32.gmra.mrb[0].mxu0 %v251
  %v561 = vpop.f32.mrb[0].mxu0
  %v562 = vadd.f32 0.0, %v561
  %v563 = vpop.f32.mrb[0].mxu0
  %v564 = vadd.f32 0.0, %v563
  %565 = vmatprep.mubr.f32.mxu0 0.0
  %566 = vmatmul.mubr.f32.gmra.mrb[0].mxu0 %v254
  %v567 = vpop.f32.mrb[0].mxu0
  %v568 = vadd.f32 0.0, %v567
  %v569 = vpop.f32.mrb[0].mxu0
  %v570 = vadd.f32 0.0, %v569
  %571 = vmatprep.mubr.f32.mxu0 0.0
  %572 = vmatmul.mubr.f32.gmra.mrb[0].mxu0 %v257
  %v573 = vpop.f32.mrb[0].mxu0
  %v574 = vadd.f32 0.0, %v573
  %v575 = vpop.f32.mrb[0].mxu0
  %v576 = vadd.f32 0.0, %v575
  %577 = vmatprep.mubr.f32.mxu0 0.0
  %578 = vmatmul.mubr.f32.gmra.mrb[0].mxu0 %v260
  %v579 = vpop.f32.mrb[0].mxu0
  %v580 = vadd.f32 0.0, %v579
  %v581 = vpop.f32.mrb[0].mxu0
  %v582 = vadd.f32 0.0, %v581
  %583 = vdwg.mxu0
  %584 = vst [vmem:[%s2] sm:$0xff] %v329
  %585 = vst [vmem:[%s2 + $0x8] sm:$0xff] %v331
  %586 = vst [vmem:[%s2 + $0x10] sm:$0xff] %v335
  %587 = vst [vmem:[%s2 + $0x18] sm:$0xff] %v337
  %588 = vst [vmem:[%s2 + $0x20] sm:$0xff] %v341
  %589 = vst [vmem:[%s2 + $0x28] sm:$0xff] %v343
  %590 = vst [vmem:[%s2 + $0x30] sm:$0xff] %v347
  %591 = vst [vmem:[%s2 + $0x38] sm:$0xff] %v349
  %592 = vst [vmem:[%s2 + $0x40] sm:$0xff] %v353
  %593 = vst [vmem:[%s2 + $0x48] sm:$0xff] %v355
  %594 = vst [vmem:[%s2 + $0x50] sm:$0xff] %v359
  %595 = vst [vmem:[%s2 + $0x58] sm:$0xff] %v361
  %596 = vst [vmem:[%s2 + $0x60] sm:$0xff] %v365
  %597 = vst [vmem:[%s2 + $0x68] sm:$0xff] %v367
  %598 = vst [vmem:[%s2 + $0x70] sm:$0xff] %v371
  %599 = vst [vmem:[%s2 + $0x78] sm:$0xff] %v373
  %600 = vst [vmem:[%s2 + $0x80] sm:$0xff] %v377
  %601 = vst [vmem:[%s2 + $0x88] sm:$0xff] %v379
  %602 = vst [vmem:[%s2 + $0x90] sm:$0xff] %v383
  %603 = vst [vmem:[%s2 + $0x98] sm:$0xff] %v385
  %604 = vst [vmem:[%s2 + $0xa0] sm:$0xff] %v389
  %605 = vst [vmem:[%s2 + $0xa8] sm:$0xff] %v391
  %606 = vst [vmem:[%s2 + $0xb0] sm:$0xff] %v395
  %607 = vst [vmem:[%s2 + $0xb8] sm:$0xff] %v397
  %608 = vst [vmem:[%s2 + $0xc0] sm:$0xff] %v401
  %609 = vst [vmem:[%s2 + $0xc8] sm:$0xff] %v403
  %610 = vst [vmem:[%s2 + $0xd0] sm:$0xff] %v407
  %611 = vst [vmem:[%s2 + $0xd8] sm:$0xff] %v409
  %612 = vst [vmem:[%s2 + $0xe0] sm:$0xff] %v413
  %613 = vst [vmem:[%s2 + $0xe8] sm:$0xff] %v415
  %614 = vst [vmem:[%s2 + $0xf0] sm:$0xff] %v419
  %615 = vst [vmem:[%s2 + $0xf8] sm:$0xff] %v421
  %s616 = scalar_lea.vmem %s2, 256
  %617 = vst [vmem:[%s616] sm:$0xff] %v490
  %618 = vst [vmem:[%s616 + $0x8] sm:$0xff] %v492
  %619 = vst [vmem:[%s616 + $0x10] sm:$0xff] %v496
  %620 = vst [vmem:[%s616 + $0x18] sm:$0xff] %v498
  %621 = vst [vmem:[%s616 + $0x20] sm:$0xff] %v502
  %622 = vst [vmem:[%s616 + $0x28] sm:$0xff] %v504
  %623 = vst [vmem:[%s616 + $0x30] sm:$0xff] %v508
  %624 = vst [vmem:[%s616 + $0x38] sm:$0xff] %v510
  %625 = vst [vmem:[%s616 + $0x40] sm:$0xff] %v514
  %626 = vst [vmem:[%s616 + $0x48] sm:$0xff] %v516
  %627 = vst [vmem:[%s616 + $0x50] sm:$0xff] %v520
  %628 = vst [vmem:[%s616 + $0x58] sm:$0xff] %v522
  %629 = vst [vmem:[%s616 + $0x60] sm:$0xff] %v526
  %630 = vst [vmem:[%s616 + $0x68] sm:$0xff] %v528
  %631 = vst [vmem:[%s616 + $0x70] sm:$0xff] %v532
  %632 = vst [vmem:[%s616 + $0x78] sm:$0xff] %v534
  %633 = vst [vmem:[%s616 + $0x80] sm:$0xff] %v538
  %634 = vst [vmem:[%s616 + $0x88] sm:$0xff] %v540
  %635 = vst [vmem:[%s616 + $0x90] sm:$0xff] %v544
  %636 = vst [vmem:[%s616 + $0x98] sm:$0xff] %v546
  %637 = vst [vmem:[%s616 + $0xa0] sm:$0xff] %v550
  %638 = vst [vmem:[%s616 + $0xa8] sm:$0xff] %v552
  %639 = vst [vmem:[%s616 + $0xb0] sm:$0xff] %v556
  %640 = vst [vmem:[%s616 + $0xb8] sm:$0xff] %v558
  %641 = vst [vmem:[%s616 + $0xc0] sm:$0xff] %v562
  %642 = vst [vmem:[%s616 + $0xc8] sm:$0xff] %v564
  %643 = vst [vmem:[%s616 + $0xd0] sm:$0xff] %v568
  %644 = vst [vmem:[%s616 + $0xd8] sm:$0xff] %v570
  %645 = vst [vmem:[%s616 + $0xe0] sm:$0xff] %v574
  %646 = vst [vmem:[%s616 + $0xe8] sm:$0xff] %v576
  %647 = vst [vmem:[%s616 + $0xf0] sm:$0xff] %v580
  %648 = vst [vmem:[%s616 + $0xf8] sm:$0xff] %v582
  // Predicated region
  $region10: #{conv2d_pallas.1} parent=0 // pred_check
    _
  $region11: #{conv2d_pallas.1} parent=0 // pred_check_branch
    %650 = sbr.rel (0) target = $region13
  $region12: #{conv2d_pallas.1} parent=0 // pred_region
    _
  $region13: #{conv2d_pallas.1} parent=0 // pred_fallthru
    _
  // Predicated region
  $region14: #{conv2d_pallas.1} parent=0 // pred_check
    _
  $region15: #{conv2d_pallas.1} parent=0 // pred_check_branch
    %652 = sbr.rel (0) target = $region17
  $region16: #{conv2d_pallas.1} parent=0 // pred_region
    _
  $region17: #{conv2d_pallas.1} parent=0 // pred_fallthru
    _

</llo_original>
